<compile_context>
chip_gen: v7x
topology: tpu7x:2x2x1
jax: 0.10.0
libtpu: 0.0.40
codegen_flags: <defaults>
</compile_context>

<pallas_src>
import functools

import jax
import jax.numpy as jnp
from jax.experimental import pallas as pl
from jax.experimental.pallas import tpu as pltpu


def _self_attn_kernel(x_ref, w_ref, b_ref, gamma_ref, o_ref, qkv_ref, *, cqp):
    _, C, TQ = o_ref.shape
    N = x_ref.shape[2]
    qi = pl.program_id(1)
    mxu_dtype = qkv_ref.dtype

    # Fused Q/K/V projection for the whole sequence, once per batch element.
    # (x block index and the scratch persist across the q-tile grid axis.)
    @pl.when(qi == 0)
    def _():
        x_full = x_ref[0].astype(mxu_dtype)                              # [C, N]
        qkv = jax.lax.dot_general(w_ref[...], x_full,
                                  (((1,), (0,)), ((), ())),
                                  preferred_element_type=jnp.float32)    # [Ctot, N]
        qkv_ref[...] = (qkv + b_ref[...]).astype(qkv_ref.dtype)

    if TQ == N:
        # Single query tile: static full-width views.
        q_t = qkv_ref[pl.ds(0, cqp), :]                                  # [Cqp, N]
        x_t = x_ref[0]                                                   # [C, N]
    else:
        # TQ is a multiple of 128 -> 128-aligned dynamic lane slice.
        qstart = pl.multiple_of(qi * TQ, TQ)
        q_t = qkv_ref[pl.ds(0, cqp), pl.ds(qstart, TQ)]                  # [Cqp, TQ]
        x_t = x_ref[0, :, pl.ds(qstart, TQ)]                             # [C, TQ]

    k = qkv_ref[pl.ds(cqp, cqp), :]                                      # [Cqp, N]
    v = qkv_ref[pl.ds(2 * cqp, C), :]                                    # [C, N]

    # energy[i, j] = sum_c q[c, i] * k[c, j]   (no explicit transpose)
    energy = jax.lax.dot_general(q_t, k, (((0,), (0,)), ((), ())),
                                 preferred_element_type=jnp.float32)     # [TQ, N]

    # Row softmax over keys (f32, max-stabilized); denom via EUP approx reciprocal.
    m = jnp.max(energy, axis=-1, keepdims=True)
    p = jnp.exp(energy - m)
    attn = p * pl.reciprocal(jnp.sum(p, axis=-1, keepdims=True), approx=True)

    # out[c, i] = sum_j v[c, j] * attn[i, j]
    out_ct = jax.lax.dot_general(v, attn.astype(mxu_dtype),
                                 (((1,), (1,)), ((), ())),
                                 preferred_element_type=jnp.float32)     # [C, TQ]

    o_ref[0] = (gamma_ref[0] * out_ct + x_t.astype(jnp.float32)).astype(o_ref.dtype)


def _pick_tq(n, tq_max):
    """Largest multiple of 128 that is <= tq_max and divides n; else the full row."""
    tq_max = max(128, (tq_max // 128) * 128)
    if n % 128 == 0:
        for tq in range(min(tq_max, n), 0, -128):
            if n % tq == 0:
                return tq
    return n


def self_attention_pallas(x_nchw, wq, bq, wk, bk, wv, bv, gamma,
                          *, mxu_dtype=jnp.float32, tq_max=512):
    """x_nchw: [B, C, H, W]. Weights in PyTorch conv layout:
       wq/wk: [C//8, C, 1, 1], wv: [C, C, 1, 1], biases: [C_out], gamma: [1]."""
    B, C, H, W = x_nchw.shape
    N = H * W
    Cq = wq.shape[0]
    cqp = ((Cq + 127) // 128) * 128           # pad Q/K channels up to a 128 multiple

    x_bcn = x_nchw.reshape(B, C, N)           # pure reshape, no transpose

    def pad_qk(w2d, b1d):
        pad = cqp - w2d.shape[0]
        return jnp.pad(w2d, ((0, pad), (0, 0))), jnp.pad(b1d, ((0, pad),))

    wq2, bq2 = pad_qk(wq.reshape(Cq, C), bq)
    wk2, bk2 = pad_qk(wk.reshape(Cq, C), bk)
    w_all = jnp.concatenate([wq2, wk2, wv.reshape(C, C)], axis=0).astype(mxu_dtype)
    b_all = jnp.concatenate([bq2, bk2, bv], axis=0).reshape(-1, 1).astype(jnp.float32)
    ctot = 2 * cqp + C
    gamma_s = gamma.reshape(1).astype(jnp.float32)

    tq = _pick_tq(N, tq_max)
    nq = N // tq

    # Explicit VMEM budget (sized from the actual buffers, with margin).
    isz = jnp.dtype(x_nchw.dtype).itemsize
    msz = jnp.dtype(mxu_dtype).itemsize
    est = (2 * C * N * isz + 2 * C * tq * isz        # x / out blocks (double-buffered)
           + 2 * (ctot * C * msz + ctot * 4)         # fused weights + bias
           + ctot * N * msz + 2 * ctot * N * 4       # Q/K/V scratch + projection temps
           + 3 * tq * N * 4)                         # energy / softmax temps
    vmem_limit = int(min(max(2 * est + (4 << 20), 16 << 20), 64 << 20))

    grid_spec = pltpu.PrefetchScalarGridSpec(
        num_scalar_prefetch=0,
        grid=(B, nq),
        in_specs=[
            pl.BlockSpec((1, C, N), lambda b, q: (b, 0, 0)),    # x: full seq, DMA'd once/batch
            pl.BlockSpec((ctot, C), lambda b, q: (0, 0)),       # fused Wq|Wk|Wv
            pl.BlockSpec((ctot, 1), lambda b, q: (0, 0)),       # fused bias
            pl.BlockSpec(memory_space=pltpu.MemorySpace.SMEM),  # gamma scalar
        ],
        out_specs=pl.BlockSpec((1, C, tq), lambda b, q: (b, 0, q)),
        scratch_shapes=[pltpu.VMEM((ctot, N), mxu_dtype)],      # persistent Q/K/V
    )

    out_bcn = pl.pallas_call(
        functools.partial(_self_attn_kernel, cqp=cqp),
        out_shape=jax.ShapeDtypeStruct((B, C, N), x_nchw.dtype),
        grid_spec=grid_spec,
        compiler_params=pltpu.CompilerParams(
            # q-tile axis must stay "arbitrary": the K/V scratch is filled at q==0 and
            # reused by later q-tiles of the same batch element.
            dimension_semantics=("parallel", "arbitrary"),
            vmem_limit_bytes=vmem_limit),
    )(x_bcn, w_all, b_all, gamma_s)

    return out_bcn.reshape(B, C, H, W)        # no transpose on the way out either


def self_attention_ref(x_nchw, wq, bq, wk, bk, wv, bv, gamma):
    """Pure-JAX reference mirroring the PyTorch forward exactly."""
    B, C, H, W = x_nchw.shape
    N = H * W
    Cq = wq.shape[0]
    x_flat = x_nchw.reshape(B, C, N)
    q = jnp.einsum("oc,bcn->bon", wq.reshape(Cq, C), x_flat) + bq[None, :, None]
    k = jnp.einsum("oc,bcn->bon", wk.reshape(Cq, C), x_flat) + bk[None, :, None]
    v = jnp.einsum("oc,bcn->bon", wv.reshape(C, C), x_flat) + bv[None, :, None]
    energy = jnp.einsum("bci,bcj->bij", q, k)
    attn = jax.nn.softmax(energy, axis=-1)
    out = jnp.einsum("bcj,bij->bci", v, attn)
    return gamma[0] * out.reshape(B, C, H, W) + x_nchw


if __name__ == "__main__":
    C = 32                       # in_channels (must be >= 8 so C // 8 >= 1)
    Cq = C // 8

    key = jax.random.PRNGKey(0)
    ks = jax.random.split(key, 8)
    wq = 0.1 * jax.random.normal(ks[0], (Cq, C, 1, 1), jnp.float32)
    bq = 0.1 * jax.random.normal(ks[1], (Cq,), jnp.float32)
    wk = 0.1 * jax.random.normal(ks[2], (Cq, C, 1, 1), jnp.float32)
    bk = 0.1 * jax.random.normal(ks[3], (Cq,), jnp.float32)
    wv = 0.1 * jax.random.normal(ks[4], (C, C, 1, 1), jnp.float32)
    bv = 0.1 * jax.random.normal(ks[5], (C,), jnp.float32)
    # Module init sets gamma = 0 (output == x); use a nonzero value to exercise attention.
    gamma = jnp.array([0.5], dtype=jnp.float32)

    # Shape 1: B=2, C=32, 8x8 (N=64, single query tile).
    x = jax.random.normal(ks[6], (2, C, 8, 8), dtype=jnp.float32)
    out = jax.block_until_ready(self_attention_pallas(x, wq, bq, wk, bk, wv, bv, gamma))
    ref = self_attention_ref(x, wq, bq, wk, bk, wv, bv, gamma)
    assert out.shape == x.shape
    assert jnp.allclose(out, ref, atol=2e-3, rtol=2e-3), "f32 mismatch vs reference"

    # Shape 2: 16x16 feature map with TQ=128 -> exercises the multi-query-tile path
    # and the persistent fused-Q/K/V scratch reuse across q tiles.
    x2 = jax.random.normal(ks[7], (1, C, 16, 16), dtype=jnp.float32)
    out2 = jax.block_until_ready(
        self_attention_pallas(x2, wq, bq, wk, bk, wv, bv, gamma, tq_max=128))
    ref2 = self_attention_ref(x2, wq, bq, wk, bk, wv, bv, gamma)
    assert jnp.allclose(out2, ref2, atol=2e-3, rtol=2e-3), "tiled mismatch vs reference"

    # bf16 MXU operands (v6e/v7x recommendation); softmax math stays f32.
    out3 = jax.block_until_ready(
        self_attention_pallas(x, wq, bq, wk, bk, wv, bv, gamma, mxu_dtype=jnp.bfloat16))
    assert jnp.allclose(out3, ref, atol=5e-2, rtol=5e-2), "bf16 mismatch vs reference"

    print("KERNEL_OK")
</pallas_src>

<mosaic_0001>
module attributes {stable_mosaic.version = 11 : i64} {
  func.func @_self_attn_kernel(%arg0: i32, %arg1: i32, %arg2: memref<1x32x64xf32, #tpu.memory_space<vmem>>, %arg3: memref<288x32xf32, #tpu.memory_space<vmem>>, %arg4: memref<288x1xf32, #tpu.memory_space<vmem>>, %arg5: memref<1xf32, #tpu.memory_space<smem>>, %arg6: memref<1x32x64xf32, #tpu.memory_space<vmem>>, %arg7: memref<288x64xf32, #tpu.memory_space<vmem>>) attributes {dimension_semantics = [#tpu.dimension_semantics<parallel>, #tpu.dimension_semantics<arbitrary>], iteration_bounds = array<i64: 2, 1>, scalar_prefetch = 0 : i64, scratch_operands = 1 : i64, tpu.core_type = #tpu.core_type<tc>, window_params = [{transform_indices = @transform_0, window_bounds = array<i64: 1, 32, 64>}, {pipeline_mode = #tpu.pipeline_mode<synchronous>, transform_indices = @transform_1, window_bounds = array<i64: 288, 32>}, {pipeline_mode = #tpu.pipeline_mode<synchronous>, transform_indices = @transform_2, window_bounds = array<i64: 288, 1>}, {transform_indices = @transform_3, window_bounds = array<i64: 1>}, {transform_indices = @transform_4, window_bounds = array<i64: 1, 32, 64>}]} {
    %c0_i32 = arith.constant 0 : i32
    %0 = arith.cmpi eq, %arg1, %c0_i32 : i32
    %1 = arith.extui %0 : i1 to i32
    %c0_i32_0 = arith.constant 0 : i32
    %2 = arith.cmpi ne, %1, %c0_i32_0 : i32
    scf.if %2 {
      %c0_14 = arith.constant 0 : index
      %c0_15 = arith.constant 0 : index
      %c0_16 = arith.constant 0 : index
      %27 = vector.load %arg2[%c0_14, %c0_15, %c0_16] : memref<1x32x64xf32, #tpu.memory_space<vmem>>, vector<1x32x64xf32>
      %28 = vector.shape_cast %27 : vector<1x32x64xf32> to vector<32x64xf32>
      %c0_17 = arith.constant 0 : index
      %c0_18 = arith.constant 0 : index
      %29 = vector.load %arg3[%c0_17, %c0_18] : memref<288x32xf32, #tpu.memory_space<vmem>>, vector<288x32xf32>
      %cst_19 = arith.constant dense<0.000000e+00> : vector<288x64xf32>
      %30 = tpu.matmul %29, %28, %cst_19 {dimension_numbers = #tpu.dot_dimension_numbers<[1], [0], [0], [1], [0, 0, 1, 1], [], []>} : vector<288x32xf32>, vector<32x64xf32>, vector<288x64xf32> -> vector<288x64xf32>
      %c0_20 = arith.constant 0 : index
      %c0_21 = arith.constant 0 : index
      %31 = vector.load %arg4[%c0_20, %c0_21] : memref<288x1xf32, #tpu.memory_space<vmem>>, vector<288x1xf32>
      %32 = vector.broadcast %31 : vector<288x1xf32> to vector<288x64xf32>
      %33 = arith.addf %30, %32 : vector<288x64xf32>
      %c0_22 = arith.constant 0 : index
      %c0_23 = arith.constant 0 : index
      %34 = vector.load %arg7[%c0_22, %c0_23] : memref<288x64xf32, #tpu.memory_space<vmem>>, vector<288x64xf32>
      tpu.vector_store %arg7[%c0_22, %c0_23], %33 {strides = array<i32>} : memref<288x64xf32, #tpu.memory_space<vmem>>, vector<288x64xf32>,
    } else {
    }
    %c0 = arith.constant 0 : index
    %c0_1 = arith.constant 0 : index
    %3 = vector.load %arg7[%c0, %c0_1] : memref<288x64xf32, #tpu.memory_space<vmem>>, vector<128x64xf32>
    %c0_2 = arith.constant 0 : index
    %c0_3 = arith.constant 0 : index
    %c0_4 = arith.constant 0 : index
    %4 = vector.load %arg2[%c0_2, %c0_3, %c0_4] : memref<1x32x64xf32, #tpu.memory_space<vmem>>, vector<1x32x64xf32>
    %5 = vector.shape_cast %4 : vector<1x32x64xf32> to vector<32x64xf32>
    %c128 = arith.constant 128 : index
    %c0_5 = arith.constant 0 : index
    %6 = vector.load %arg7[%c128, %c0_5] : memref<288x64xf32, #tpu.memory_space<vmem>>, vector<128x64xf32>
    %c256 = arith.constant 256 : index
    %c0_6 = arith.constant 0 : index
    %7 = vector.load %arg7[%c256, %c0_6] : memref<288x64xf32, #tpu.memory_space<vmem>>, vector<32x64xf32>
    %cst = arith.constant dense<0.000000e+00> : vector<64x64xf32>
    %8 = tpu.matmul %3, %6, %cst {dimension_numbers = #tpu.dot_dimension_numbers<[0], [0], [1], [1], [0, 1, 1, 1], [], []>} : vector<128x64xf32>, vector<128x64xf32>, vector<64x64xf32> -> vector<64x64xf32>
    %cst_7 = arith.constant dense<0xFF800000> : vector<64xf32>
    %9 = vector.multi_reduction <maximumf>, %8, %cst_7 [1] : vector<64x64xf32> to vector<64xf32>
    %10 = vector.shape_cast %9 : vector<64xf32> to vector<64x1xf32>
    %11 = vector.broadcast %10 : vector<64x1xf32> to vector<64x64xf32>
    %12 = arith.subf %8, %11 : vector<64x64xf32>
    %13 = math.exp %12 : vector<64x64xf32>
    %cst_8 = arith.constant dense<0.000000e+00> : vector<64xf32>
    %14 = vector.multi_reduction <add>, %13, %cst_8 [1] : vector<64x64xf32> to vector<64xf32>
    %15 = vector.shape_cast %14 : vector<64xf32> to vector<64x1xf32>
    %16 = tpu.reciprocal %15 {approx = true} : vector<64x1xf32> -> vector<64x1xf32>
    %17 = vector.broadcast %16 : vector<64x1xf32> to vector<64x64xf32>
    %18 = arith.mulf %13, %17 : vector<64x64xf32>
    %cst_9 = arith.constant dense<0.000000e+00> : vector<32x64xf32>
    %19 = tpu.matmul %7, %18, %cst_9 {dimension_numbers = #tpu.dot_dimension_numbers<[1], [1], [0], [0], [0, 0, 1, 0], [], []>} : vector<32x64xf32>, vector<64x64xf32>, vector<32x64xf32> -> vector<32x64xf32>
    %c0_10 = arith.constant 0 : index
    %20 = memref.load %arg5[%c0_10] : memref<1xf32, #tpu.memory_space<smem>>
    %21 = vector.broadcast %20 : f32 to vector<32x64xf32>
    %22 = arith.mulf %21, %19 : vector<32x64xf32>
    %23 = arith.addf %22, %5 : vector<32x64xf32>
    %c0_11 = arith.constant 0 : index
    %c0_12 = arith.constant 0 : index
    %c0_13 = arith.constant 0 : index
    %24 = vector.load %arg6[%c0_11, %c0_12, %c0_13] : memref<1x32x64xf32, #tpu.memory_space<vmem>>, vector<1x32x64xf32>
    %25 = vector.shape_cast %24 : vector<1x32x64xf32> to vector<32x64xf32>
    %26 = vector.shape_cast %23 : vector<32x64xf32> to vector<1x32x64xf32>
    tpu.vector_store %arg6[%c0_11, %c0_12, %c0_13], %26 {strides = array<i32>} : memref<1x32x64xf32, #tpu.memory_space<vmem>>, vector<1x32x64xf32>,
    return
  }
  func.func @transform_0(%arg0: i32, %arg1: i32) -> (i32, i32, i32) {
    %c0_i32 = arith.constant 0 : i32
    %c0_i32_0 = arith.constant 0 : i32
    %c0_i32_1 = arith.constant 0 : i32
    return %arg0, %c0_i32, %c0_i32_0 : i32, i32, i32
  }
  func.func @transform_1(%arg0: i32, %arg1: i32) -> (i32, i32) {
    %c0_i32 = arith.constant 0 : i32
    %c0_i32_0 = arith.constant 0 : i32
    %c0_i32_1 = arith.constant 0 : i32
    return %c0_i32, %c0_i32_0 : i32, i32
  }
  func.func @transform_2(%arg0: i32, %arg1: i32) -> (i32, i32) {
    %c0_i32 = arith.constant 0 : i32
    %c0_i32_0 = arith.constant 0 : i32
    %c0_i32_1 = arith.constant 0 : i32
    return %c0_i32, %c0_i32_0 : i32, i32
  }
  func.func @transform_3(%arg0: i32, %arg1: i32) -> i32 {
    %c0_i32 = arith.constant 0 : i32
    %c0_i32_0 = arith.constant 0 : i32
    return %c0_i32 : i32
  }
  func.func @transform_4(%arg0: i32, %arg1: i32) -> (i32, i32, i32) {
    %c0_i32 = arith.constant 0 : i32
    %c0_i32_0 = arith.constant 0 : i32
    return %arg0, %c0_i32, %arg1 : i32, i32, i32
  }
}

</mosaic_0001>

<llo_original>
// kernel: tpu_custom_call.1
$region0: #{tpu_custom_call.1}
  #allocation0 [shape = 'u32[]', space=smem, size = 0x4, offset = 0x4, fixed_abs, tag = 'smem constant byte address 0x4 - core index']
  #allocation1 [shape = 'u32[144,128]{1,0:T(1,128)}', space=vmem, size = 0x12000, scoped, tag = 'internal scratch']
  #allocation2 [shape = 'f32[288,64]{1,0:T(8,128)}', space=vmem, size = 0x24000, scoped, tag = 'scratch operand']
  #allocation3 [shape = 'f32[1]{0:T(128)S(6)}', space=smem, size = 0x200, scoped, tag = 'scoped memory for tpu_custom_call.1']
  %s0 = inlined_call_operand.vmem [shape: f32[2,32,64], index: 0, kind: input, shape index: {}]
  %s1 = inlined_call_operand.vmem [shape: f32[288,32], index: 1, kind: input, shape index: {}]
  %s2 = inlined_call_operand.vmem [shape: f32[288,1], index: 2, kind: input, shape index: {}]
  %s3 = inlined_call_operand.<no memory space> [shape: f32[1], index: 3, kind: input, shape index: {}]
  %s4 = inlined_call_operand.hbm [shape: f32[2,32,64], index: 4, kind: output, shape index: {}]
  %s5 = sld [smem:[#allocation0]]
  $region53: #{tpu_custom_call.1} parent=0
    _
  %s7 = ssub.s32 1, %s5
  %s8 = scalar_select 0, %s7, %s5
  %9 = sst [smem:[#allocation3]] %s3
  $region1: #{tpu_custom_call.1} parent=0
    #allocation4 [shape = 'u8[32768]{0}', space=vmem, size = 0x8000, scoped, tag = 'output window, operand 0']
    #allocation5 [shape = 's32[2]{0}', space=sflag, size = 0x8, scoped, tag = 'scoped memory for tpu_custom_call.1']
    %10 = vsyncpa [#allocation5], 0
    %s11 = scalar_lea.sflag [#allocation5], 1
    %12 = vsyncpa %s11, 0
    loop: start=0, step=1, limit=4
    $region2: #{tpu_custom_call.1} parent=1 // loop_pre_header
      _
    $region3: #{tpu_custom_call.1} parent=1 // loop_header
      %s14 = sphi 0, %s18
      %p15 = scmp.ge.s32.totalorder %s14, 4
      %s21 = sphi 0, %s33
      %s22 = sphi 0, %s29
      %s23 = sphi 0, %s21
      %s24 = sphi 0, %s22
      %s25 = sphi 0, %s23
      %s26 = sphi 0, %s24
      %s36 = sphi 0, %s38
      %s39 = sphi 0, %s36
      %s40 = sphi 0, %s39
      %s56 = sphi 0, %s40
      %s60 = sphi 0, %s60
      %s62 = sphi 0, %s60
      %s63 = sphi 0, %s62
      %s77 = sphi 0, %s63
      %s81 = sphi 0, %s81
      %s83 = sphi 0, %s81
      %s84 = sphi 0, %s83
      %s98 = sphi 0, %s84
      %s102 = sphi 0, %s102
      %s104 = sphi 0, %s102
      %s105 = sphi 0, %s104
      %s119 = sphi 0, %s105
      %s127 = sphi 0, %s129
      %s130 = sphi 0, %s127
      %s131 = sphi 0, %s130
      %s147 = sphi 0, %s131
    $region4: #{tpu_custom_call.1} parent=1 // loop_header_branch
      %17 = sbr.rel (%p15) target = $region8
    $region5: #{tpu_custom_call.1} parent=1 // loop_body
      %s19 = ssub.s32 %s14, 1
      %s20 = ssub.s32 %s14, 2
      %s27 = sadd.s32 1, %s22
      %p28 = scmp.ge.s32.totalorder %s27, 1
      %s29 = scalar_select %p28, 0, %s27
      %s30 = sadd.s32 1, %s21
      %s31 = scalar_select %p28, %s30, %s21
      %p32 = scmp.ge.s32.totalorder %s31, 2
      %s33 = scalar_select %p32, 0, %s31
      %s34 = ssub.s32 %s21, %s33
      %p35 = scmp.eq.s32.totalorder %s34, 0
      %s37 = sadd.s32 %s36, 1
      %s38 = scalar_select %p35, %s36, %s37
      %p41 = pneg %p35
      %p42 = scmp.eq.s32.totalorder %s14, 1
      %p43 = por %p41, %p42
      %p44 = scmp.ne.s32.totalorder %s36, %s39
      %p45 = scmp.eq.s32.totalorder %s14, 0
      %p46 = por %p44, %p45
      %p47 = scmp.ne.s32.totalorder %s36, %s39
      %p48 = scmp.eq.s32.totalorder %s19, 1
      %p49 = por %p47, %p48
      %p50 = scmp.ne.s32.totalorder %s39, %s40
      %p51 = scmp.eq.s32.totalorder %s19, 0
      %p52 = por %p50, %p51
      %p53 = scmp.ne.s32.totalorder %s39, %s40
      %p54 = scmp.eq.s32.totalorder %s20, 1
      %p55 = por %p53, %p54
      %p57 = scmp.ne.s32.totalorder %s40, %s56
      %p58 = scmp.eq.s32.totalorder %s20, 0
      %p59 = por %p57, %p58
      %s61 = sadd.s32 %s60, 1
      %p64 = scmp.eq.s32.totalorder %s14, 1
      %p65 = scmp.ne.s32.totalorder %s60, %s62
      %p66 = scmp.eq.s32.totalorder %s14, 0
      %p67 = por %p65, %p66
      %p68 = scmp.ne.s32.totalorder %s60, %s62
      %p69 = scmp.eq.s32.totalorder %s19, 1
      %p70 = por %p68, %p69
      %p71 = scmp.ne.s32.totalorder %s62, %s63
      %p72 = scmp.eq.s32.totalorder %s19, 0
      %p73 = por %p71, %p72
      %p74 = scmp.ne.s32.totalorder %s62, %s63
      %p75 = scmp.eq.s32.totalorder %s20, 1
      %p76 = por %p74, %p75
      %p78 = scmp.ne.s32.totalorder %s63, %s77
      %p79 = scmp.eq.s32.totalorder %s20, 0
      %p80 = por %p78, %p79
      %s82 = sadd.s32 %s81, 1
      %p85 = scmp.eq.s32.totalorder %s14, 1
      %p86 = scmp.ne.s32.totalorder %s81, %s83
      %p87 = scmp.eq.s32.totalorder %s14, 0
      %p88 = por %p86, %p87
      %p89 = scmp.ne.s32.totalorder %s81, %s83
      %p90 = scmp.eq.s32.totalorder %s19, 1
      %p91 = por %p89, %p90
      %p92 = scmp.ne.s32.totalorder %s83, %s84
      %p93 = scmp.eq.s32.totalorder %s19, 0
      %p94 = por %p92, %p93
      %p95 = scmp.ne.s32.totalorder %s83, %s84
      %p96 = scmp.eq.s32.totalorder %s20, 1
      %p97 = por %p95, %p96
      %p99 = scmp.ne.s32.totalorder %s84, %s98
      %p100 = scmp.eq.s32.totalorder %s20, 0
      %p101 = por %p99, %p100
      %s103 = sadd.s32 %s102, 1
      %p106 = scmp.eq.s32.totalorder %s14, 1
      %p107 = scmp.ne.s32.totalorder %s102, %s104
      %p108 = scmp.eq.s32.totalorder %s14, 0
      %p109 = por %p107, %p108
      %p110 = scmp.ne.s32.totalorder %s102, %s104
      %p111 = scmp.eq.s32.totalorder %s19, 1
      %p112 = por %p110, %p111
      %p113 = scmp.ne.s32.totalorder %s104, %s105
      %p114 = scmp.eq.s32.totalorder %s19, 0
      %p115 = por %p113, %p114
      %p116 = scmp.ne.s32.totalorder %s104, %s105
      %p117 = scmp.eq.s32.totalorder %s20, 1
      %p118 = por %p116, %p117
      %p120 = scmp.ne.s32.totalorder %s105, %s119
      %p121 = scmp.eq.s32.totalorder %s20, 0
      %p122 = por %p120, %p121
      %s123 = ssub.s32 %s21, %s33
      %s124 = ssub.s32 %s22, %s29
      %s125 = sor.u32 %s123, %s124
      %p126 = scmp.eq.s32.totalorder %s125, 0
      %s128 = sadd.s32 %s127, 1
      %s129 = scalar_select %p126, %s127, %s128
      %p132 = pneg %p126
      %p133 = scmp.eq.s32.totalorder %s14, 1
      %p134 = por %p132, %p133
      %p135 = scmp.ne.s32.totalorder %s127, %s130
      %p136 = scmp.eq.s32.totalorder %s14, 0
      %p137 = por %p135, %p136
      %p138 = scmp.ne.s32.totalorder %s127, %s130
      %p139 = scmp.eq.s32.totalorder %s19, 1
      %p140 = por %p138, %p139
      %p141 = scmp.ne.s32.totalorder %s130, %s131
      %p142 = scmp.eq.s32.totalorder %s19, 0
      %p143 = por %p141, %p142
      %p144 = scmp.ne.s32.totalorder %s130, %s131
      %p145 = scmp.eq.s32.totalorder %s20, 1
      %p146 = por %p144, %p145
      %p148 = scmp.ne.s32.totalorder %s131, %s147
      %p149 = scmp.eq.s32.totalorder %s20, 0
      %p150 = por %p148, %p149
      %p151 = scmp.le.s32.totalorder 1, %s14
      %p152 = scmp.lt.s32.totalorder %s14, 3
      %p153 = pnand %p151, %p152
      %p154 = pneg %p153
      // Predicated region
      $region9: #{tpu_custom_call.1} parent=5 // pred_check
        _
      $region10: #{tpu_custom_call.1} parent=5 // pred_check_branch
        %156 = sbr.rel (%p153) target = $region12
      $region11: #{tpu_custom_call.1} parent=5 // pred_region
        %s157 = ssub.s32 %s14, 1
        // Predicated region
        $region13: #{tpu_custom_call.1} parent=11 // pred_check
          %p158 = pneg %p73
        $region14: #{tpu_custom_call.1} parent=11 // pred_check_branch
          %160 = sbr.rel (%p158) target = $region16
        $region15: #{tpu_custom_call.1} parent=11 // pred_region
          _
        $region16: #{tpu_custom_call.1} parent=11 // pred_fallthru
          _
        // Predicated region
        $region17: #{tpu_custom_call.1} parent=11 // pred_check
          %p161 = pneg %p94
        $region18: #{tpu_custom_call.1} parent=11 // pred_check_branch
          %163 = sbr.rel (%p161) target = $region20
        $region19: #{tpu_custom_call.1} parent=11 // pred_region
          _
        $region20: #{tpu_custom_call.1} parent=11 // pred_fallthru
          _
        // Predicated region
        $region21: #{tpu_custom_call.1} parent=11 // pred_check
          %p164 = pneg %p115
        $region22: #{tpu_custom_call.1} parent=11 // pred_check_branch
          %166 = sbr.rel (%p164) target = $region24
        $region23: #{tpu_custom_call.1} parent=11 // pred_region
          _
        $region24: #{tpu_custom_call.1} parent=11 // pred_fallthru
          _
      $region12: #{tpu_custom_call.1} parent=5 // pred_fallthru
        _
      %p167 = scmp.lt.s32.totalorder %s14, 2
      // Predicated region
      $region25: #{tpu_custom_call.1} parent=5 // pred_check
        %p168 = pneg %p167
      $region26: #{tpu_custom_call.1} parent=5 // pred_check_branch
        %170 = sbr.rel (%p168) target = $region28
      $region27: #{tpu_custom_call.1} parent=5 // pred_region
        // Predicated region
        $region29: #{tpu_custom_call.1} parent=27 // pred_check
          %p171 = pneg %p46
        $region30: #{tpu_custom_call.1} parent=27 // pred_check_branch
          %173 = sbr.rel (%p171) target = $region32
        $region31: #{tpu_custom_call.1} parent=27 // pred_region
          %p174 = scmp.lt.s32.totalorder %s21, 1
          %s175 = scalar_select %p174, %s21, 1
          %s176 = smul.addr %s175, 4
          %s177 = smul.addr %s176, 8
          %s178 = scalar_lea.vmem %s0, %s177
        $region32: #{tpu_custom_call.1} parent=27 // pred_fallthru
          _
      $region28: #{tpu_custom_call.1} parent=5 // pred_fallthru
        _
      %p179 = scmp.le.s32.totalorder 1, %s14
      %p180 = scmp.lt.s32.totalorder %s14, 3
      %p181 = pnand %p179, %p180
      %p182 = pneg %p181
      // Predicated region
      $region33: #{tpu_custom_call.1} parent=5 // pred_check
        _
      $region34: #{tpu_custom_call.1} parent=5 // pred_check_branch
        %184 = sbr.rel (%p181) target = $region36
      $region35: #{tpu_custom_call.1} parent=5 // pred_region
        %s185 = ssub.s32 %s14, 1
        %p186 = scmp.lt.s32.totalorder %s23, 1
        %s187 = scalar_select %p186, %s23, 1
        %s188 = smul.addr %s187, 4
        %s189 = smul.addr %s188, 8
        %s190 = scalar_lea.vmem %s0, %s189
        %p191 = pneg %p52
        %p192 = pneg %p49
        %p193 = pneg %p73
        %p194 = pneg %p70
        %p195 = pneg %p94
        %p196 = pneg %p91
        %p197 = pneg %p115
        %p198 = pneg %p112
        %p199 = pneg %p143
        %p200 = pneg %p140
        %s201 = sand.u32 %s130, 1
        %s202 = scalar_lea.sflag [#allocation5], %s201
        %s203 = sand.u32 %s130, 1
        %s204 = smul.addr %s203, 32
        %s205 = scalar_lea.vmem [#allocation4], %s204
        %p206 = scmp.lt.s32.totalorder %s23, 1
        %s207 = scalar_select %p206, %s23, 1
        %s208 = smul.addr %s207, 4
        %s209 = smul.addr %s208, 8
        %s210 = scalar_lea.vmem %s0, %s209
        %p211 = scmp.eq.s32.totalorder %s24, 0
        // Predicated region
        $region37: #{tpu_custom_call.1} parent=35 // pred_check
          %p212 = pneg %p211
        $region38: #{tpu_custom_call.1} parent=35 // pred_check_branch
          %214 = sbr.rel (%p212) target = $region40
        $region39: #{tpu_custom_call.1} parent=35 // pred_region
          %v215 = vld [vmem:[%s210] sm:$0xff]
          %v216 = vld [vmem:[%s210 + $0x8] sm:$0xff]
          %v217 = vld [vmem:[%s210 + $0x10] sm:$0xff]
          %v218 = vld [vmem:[%s210 + $0x18] sm:$0xff]
          %v219 = vld [vmem:[%s1] sm:$0xff]
          %v220 = vld [vmem:[%s1 + $0x8] sm:$0xff]
          %v221 = vld [vmem:[%s1 + $0x10] sm:$0xff]
          %v222 = vld [vmem:[%s1 + $0x18] sm:$0xff]
          %v223 = vld [vmem:[%s1 + $0x20] sm:$0xff]
          %v224 = vld [vmem:[%s1 + $0x28] sm:$0xff]
          %v225 = vld [vmem:[%s1 + $0x30] sm:$0xff]
          %v226 = vld [vmem:[%s1 + $0x38] sm:$0xff]
          %v227 = vld [vmem:[%s1 + $0x40] sm:$0xff]
          %v228 = vld [vmem:[%s1 + $0x48] sm:$0xff]
          %v229 = vld [vmem:[%s1 + $0x50] sm:$0xff]
          %v230 = vld [vmem:[%s1 + $0x58] sm:$0xff]
          %v231 = vld [vmem:[%s1 + $0x60] sm:$0xff]
          %v232 = vld [vmem:[%s1 + $0x68] sm:$0xff]
          %v233 = vld [vmem:[%s1 + $0x70] sm:$0xff]
          %v234 = vld [vmem:[%s1 + $0x78] sm:$0xff]
          %v235 = vld [vmem:[%s1 + $0x80] sm:$0xff]
          %v236 = vld [vmem:[%s1 + $0x88] sm:$0xff]
          %v237 = vld [vmem:[%s1 + $0x90] sm:$0xff]
          %v238 = vld [vmem:[%s1 + $0x98] sm:$0xff]
          %v239 = vld [vmem:[%s1 + $0xa0] sm:$0xff]
          %v240 = vld [vmem:[%s1 + $0xa8] sm:$0xff]
          %v241 = vld [vmem:[%s1 + $0xb0] sm:$0xff]
          %v242 = vld [vmem:[%s1 + $0xb8] sm:$0xff]
          %v243 = vld [vmem:[%s1 + $0xc0] sm:$0xff]
          %v244 = vld [vmem:[%s1 + $0xc8] sm:$0xff]
          %v245 = vld [vmem:[%s1 + $0xd0] sm:$0xff]
          %v246 = vld [vmem:[%s1 + $0xd8] sm:$0xff]
          %v247 = vld [vmem:[%s1 + $0xe0] sm:$0xff]
          %v248 = vld [vmem:[%s1 + $0xe8] sm:$0xff]
          %v249 = vld [vmem:[%s1 + $0xf0] sm:$0xff]
          %v250 = vld [vmem:[%s1 + $0xf8] sm:$0xff]
          %v251 = vld [vmem:[%s1 + $0x100] sm:$0xff]
          %v252 = vld [vmem:[%s1 + $0x108] sm:$0xff]
          %v253 = vld [vmem:[%s1 + $0x110] sm:$0xff]
          %v254 = vld [vmem:[%s1 + $0x118] sm:$0xff]
          %v255 = vld [vmem:[%s2] sm:$0xff]
          %v256 = vld [vmem:[%s2 + $0x8] sm:$0xff]
          %v257 = vld [vmem:[%s2 + $0x10] sm:$0xff]
          %v258 = vld [vmem:[%s2 + $0x18] sm:$0xff]
          %v259 = vld [vmem:[%s2 + $0x20] sm:$0xff]
          %v260 = vld [vmem:[%s2 + $0x28] sm:$0xff]
          %v261 = vld [vmem:[%s2 + $0x30] sm:$0xff]
          %v262 = vld [vmem:[%s2 + $0x38] sm:$0xff]
          %v263 = vld [vmem:[%s2 + $0x40] sm:$0xff]
          %v264 = vld [vmem:[%s2 + $0x48] sm:$0xff]
          %v265 = vld [vmem:[%s2 + $0x50] sm:$0xff]
          %v266 = vld [vmem:[%s2 + $0x58] sm:$0xff]
          %v267 = vld [vmem:[%s2 + $0x60] sm:$0xff]
          %v268 = vld [vmem:[%s2 + $0x68] sm:$0xff]
          %v269 = vld [vmem:[%s2 + $0x70] sm:$0xff]
          %v270 = vld [vmem:[%s2 + $0x78] sm:$0xff]
          %v271 = vld [vmem:[%s2 + $0x80] sm:$0xff]
          %v272 = vld [vmem:[%s2 + $0x88] sm:$0xff]
          %v273 = vld [vmem:[%s2 + $0x90] sm:$0xff]
          %v274 = vld [vmem:[%s2 + $0x98] sm:$0xff]
          %v275 = vld [vmem:[%s2 + $0xa0] sm:$0xff]
          %v276 = vld [vmem:[%s2 + $0xa8] sm:$0xff]
          %v277 = vld [vmem:[%s2 + $0xb0] sm:$0xff]
          %v278 = vld [vmem:[%s2 + $0xb8] sm:$0xff]
          %v279 = vld [vmem:[%s2 + $0xc0] sm:$0xff]
          %v280 = vld [vmem:[%s2 + $0xc8] sm:$0xff]
          %v281 = vld [vmem:[%s2 + $0xd0] sm:$0xff]
          %v282 = vld [vmem:[%s2 + $0xd8] sm:$0xff]
          %v283 = vld [vmem:[%s2 + $0xe0] sm:$0xff]
          %v284 = vld [vmem:[%s2 + $0xe8] sm:$0xff]
          %v285 = vld [vmem:[%s2 + $0xf0] sm:$0xff]
          %v286 = vld [vmem:[%s2 + $0xf8] sm:$0xff]
          %v287 = vld [vmem:[%s2 + $0x100] sm:$0xff]
          %v288 = vld [vmem:[%s2 + $0x108] sm:$0xff]
          %v289 = vld [vmem:[%s2 + $0x110] sm:$0xff]
          %v290 = vld [vmem:[%s2 + $0x118] sm:$0xff]
          %292 = vset.pattern.permute.xlu0 0
          %293 = vperm.xlu0 %292, %v255
          %v294 = vpop.permute.xlu0 %293
          %297 = vset.pattern.permute.xlu0 0
          %298 = vperm.xlu0 %297, %v256
          %v299 = vpop.permute.xlu0 %298
          %302 = vset.pattern.permute.xlu0 0
          %303 = vperm.xlu0 %302, %v257
          %v304 = vpop.permute.xlu0 %303
          %307 = vset.pattern.permute.xlu0 0
          %308 = vperm.xlu0 %307, %v258
          %v309 = vpop.permute.xlu0 %308
          %312 = vset.pattern.permute.xlu0 0
          %313 = vperm.xlu0 %312, %v259
          %v314 = vpop.permute.xlu0 %313
          %317 = vset.pattern.permute.xlu0 0
          %318 = vperm.xlu0 %317, %v260
          %v319 = vpop.permute.xlu0 %318
          %322 = vset.pattern.permute.xlu0 0
          %323 = vperm.xlu0 %322, %v261
          %v324 = vpop.permute.xlu0 %323
          %327 = vset.pattern.permute.xlu0 0
          %328 = vperm.xlu0 %327, %v262
          %v329 = vpop.permute.xlu0 %328
          %332 = vset.pattern.permute.xlu0 0
          %333 = vperm.xlu0 %332, %v263
          %v334 = vpop.permute.xlu0 %333
          %337 = vset.pattern.permute.xlu0 0
          %338 = vperm.xlu0 %337, %v264
          %v339 = vpop.permute.xlu0 %338
          %342 = vset.pattern.permute.xlu0 0
          %343 = vperm.xlu0 %342, %v265
          %v344 = vpop.permute.xlu0 %343
          %347 = vset.pattern.permute.xlu0 0
          %348 = vperm.xlu0 %347, %v266
          %v349 = vpop.permute.xlu0 %348
          %352 = vset.pattern.permute.xlu0 0
          %353 = vperm.xlu0 %352, %v267
          %v354 = vpop.permute.xlu0 %353
          %357 = vset.pattern.permute.xlu0 0
          %358 = vperm.xlu0 %357, %v268
          %v359 = vpop.permute.xlu0 %358
          %362 = vset.pattern.permute.xlu0 0
          %363 = vperm.xlu0 %362, %v269
          %v364 = vpop.permute.xlu0 %363
          %367 = vset.pattern.permute.xlu0 0
          %368 = vperm.xlu0 %367, %v270
          %v369 = vpop.permute.xlu0 %368
          %372 = vset.pattern.permute.xlu0 0
          %373 = vperm.xlu0 %372, %v271
          %v374 = vpop.permute.xlu0 %373
          %377 = vset.pattern.permute.xlu0 0
          %378 = vperm.xlu0 %377, %v272
          %v379 = vpop.permute.xlu0 %378
          %382 = vset.pattern.permute.xlu0 0
          %383 = vperm.xlu0 %382, %v273
          %v384 = vpop.permute.xlu0 %383
          %387 = vset.pattern.permute.xlu0 0
          %388 = vperm.xlu0 %387, %v274
          %v389 = vpop.permute.xlu0 %388
          %392 = vset.pattern.permute.xlu0 0
          %393 = vperm.xlu0 %392, %v275
          %v394 = vpop.permute.xlu0 %393
          %397 = vset.pattern.permute.xlu0 0
          %398 = vperm.xlu0 %397, %v276
          %v399 = vpop.permute.xlu0 %398
          %402 = vset.pattern.permute.xlu0 0
          %403 = vperm.xlu0 %402, %v277
          %v404 = vpop.permute.xlu0 %403
          %407 = vset.pattern.permute.xlu0 0
          %408 = vperm.xlu0 %407, %v278
          %v409 = vpop.permute.xlu0 %408
          %412 = vset.pattern.permute.xlu0 0
          %413 = vperm.xlu0 %412, %v279
          %v414 = vpop.permute.xlu0 %413
          %417 = vset.pattern.permute.xlu0 0
          %418 = vperm.xlu0 %417, %v280
          %v419 = vpop.permute.xlu0 %418
          %422 = vset.pattern.permute.xlu0 0
          %423 = vperm.xlu0 %422, %v281
          %v424 = vpop.permute.xlu0 %423
          %427 = vset.pattern.permute.xlu0 0
          %428 = vperm.xlu0 %427, %v282
          %v429 = vpop.permute.xlu0 %428
          %432 = vset.pattern.permute.xlu0 0
          %433 = vperm.xlu0 %432, %v283
          %v434 = vpop.permute.xlu0 %433
          %437 = vset.pattern.permute.xlu0 0
          %438 = vperm.xlu0 %437, %v284
          %v439 = vpop.permute.xlu0 %438
          %442 = vset.pattern.permute.xlu0 0
          %443 = vperm.xlu0 %442, %v285
          %v444 = vpop.permute.xlu0 %443
          %447 = vset.pattern.permute.xlu0 0
          %448 = vperm.xlu0 %447, %v286
          %v449 = vpop.permute.xlu0 %448
          %452 = vset.pattern.permute.xlu0 0
          %453 = vperm.xlu0 %452, %v287
          %v454 = vpop.permute.xlu0 %453
          %457 = vset.pattern.permute.xlu0 0
          %458 = vperm.xlu0 %457, %v288
          %v459 = vpop.permute.xlu0 %458
          %462 = vset.pattern.permute.xlu0 0
          %463 = vperm.xlu0 %462, %v289
          %v464 = vpop.permute.xlu0 %463
          %467 = vset.pattern.permute.xlu0 0
          %468 = vperm.xlu0 %467, %v290
          %v469 = vpop.permute.xlu0 %468
          %vm471 = vcmask 261120
          %v473 = vsel %vm471, %v219, 0
          %v476 = vsel %vm471, %v220, 0
          %v479 = vsel %vm471, %v221, 0
          %v482 = vsel %vm471, %v222, 0
          %v485 = vsel %vm471, %v223, 0
          %v488 = vsel %vm471, %v224, 0
          %v491 = vsel %vm471, %v225, 0
          %v494 = vsel %vm471, %v226, 0
          %v497 = vsel %vm471, %v227, 0
          %v500 = vsel %vm471, %v228, 0
          %v503 = vsel %vm471, %v229, 0
          %v506 = vsel %vm471, %v230, 0
          %v509 = vsel %vm471, %v231, 0
          %v512 = vsel %vm471, %v232, 0
          %v515 = vsel %vm471, %v233, 0
          %v518 = vsel %vm471, %v234, 0
          %v521 = vsel %vm471, %v235, 0
          %v524 = vsel %vm471, %v236, 0
          %v527 = vsel %vm471, %v237, 0
          %v530 = vsel %vm471, %v238, 0
          %v533 = vsel %vm471, %v239, 0
          %v536 = vsel %vm471, %v240, 0
          %v539 = vsel %vm471, %v241, 0
          %v542 = vsel %vm471, %v242, 0
          %v545 = vsel %vm471, %v243, 0
          %v548 = vsel %vm471, %v244, 0
          %v551 = vsel %vm471, %v245, 0
          %v554 = vsel %vm471, %v246, 0
          %v557 = vsel %vm471, %v247, 0
          %v560 = vsel %vm471, %v248, 0
          %v563 = vsel %vm471, %v249, 0
          %v566 = vsel %vm471, %v250, 0
          %v569 = vsel %vm471, %v251, 0
          %v572 = vsel %vm471, %v252, 0
          %v575 = vsel %vm471, %v253, 0
          %v578 = vsel %vm471, %v254, 0
          %580 = vmatprep.subr.mxu0 0.0
          %581 = vmatpush1.msra.mxu0 %v215
          %582 = vmatprep.subr.mxu0 0.0
          %583 = vmatpush1.msra.mxu0 %v216
          %584 = vmatprep.subr.mxu0 0.0
          %585 = vmatpush1.msra.mxu0 %v217
          %586 = vmatprep.subr.mxu0 0.0
          %587 = vmatpush1.msra.mxu0 %v218
          %588 = vmatprep.subr.mxu0 0.0
          %589 = vmatpush1.msra.mxu0 0.0
          %590 = vmatprep.subr.mxu0 0.0
          %591 = vmatpush1.msra.mxu0 0.0
          %592 = vmatprep.subr.mxu0 0.0
          %593 = vmatpush1.msra.mxu0 0.0
          %594 = vmatprep.subr.mxu0 0.0
          %595 = vmatpush1.msra.mxu0 0.0
          %596 = vmatprep.subr.mxu0 0.0
          %597 = vmatpush1.msra.mxu0 0.0
          %598 = vmatprep.subr.mxu0 0.0
          %599 = vmatpush1.msra.mxu0 0.0
          %600 = vmatprep.subr.mxu0 0.0
          %601 = vmatpush1.msra.mxu0 0.0
          %602 = vmatprep.subr.mxu0 0.0
          %603 = vmatpush1.msra.mxu0 0.0
          %604 = vmatprep.subr.mxu0 0.0
          %605 = vmatpush1.msra.mxu0 0.0
          %606 = vmatprep.subr.mxu0 0.0
          %607 = vmatpush1.msra.mxu0 0.0
          %608 = vmatprep.subr.mxu0 0.0
          %609 = vmatpush1.msra.mxu0 0.0
          %610 = vmatprep.subr.mxu0 0.0
          %611 = vmatpush1.msra.mxu0 0.0
          %612 = vmatprep.subr.mxu0 0.0
          %613 = vmatpush1.msra.mxu0 0.0
          %614 = vmatprep.subr.mxu0 0.0
          %615 = vmatpush1.msra.mxu0 0.0
          %616 = vmatprep.subr.mxu0 0.0
          %617 = vmatpush1.msra.mxu0 0.0
          %618 = vmatprep.subr.mxu0 0.0
          %619 = vmatpush1.msra.mxu0 0.0
          %620 = vmatprep.subr.mxu0 0.0
          %621 = vmatpush1.msra.mxu0 0.0
          %622 = vmatprep.subr.mxu0 0.0
          %623 = vmatpush1.msra.mxu0 0.0
          %624 = vmatprep.subr.mxu0 0.0
          %625 = vmatpush1.msra.mxu0 0.0
          %626 = vmatprep.subr.mxu0 0.0
          %627 = vmatpush1.msra.mxu0 0.0
          %628 = vmatprep.subr.mxu0 0.0
          %629 = vmatpush1.msra.mxu0 0.0
          %630 = vmatprep.subr.mxu0 0.0
          %631 = vmatpush1.msra.mxu0 0.0
          %632 = vmatprep.subr.mxu0 0.0
          %633 = vmatpush1.msra.mxu0 0.0
          %634 = vmatprep.subr.mxu0 0.0
          %635 = vmatpush1.msra.mxu0 0.0
          %636 = vmatprep.subr.mxu0 0.0
          %637 = vmatpush1.msra.mxu0 0.0
          %638 = vmatprep.subr.mxu0 0.0
          %639 = vmatpush1.msra.mxu0 0.0
          %640 = vmatprep.subr.mxu0 0.0
          %641 = vmatpush1.msra.mxu0 0.0
          %642 = vmatprep.subr.mxu0 0.0
          %643 = vmatpush1.msra.mxu0 0.0
          %644 = vmatprep.mubr.f32.mxu0 0.0
          %645 = vmatmul.mubr.f32.gmra.mrb[0].mxu0 %v473
          %v646 = vpop.f32.mrb[0].mxu0
          %v647 = vadd.f32 %v294, %v646
          %v648 = vpop.f32.mrb[0].mxu0
          %649 = vmatprep.mubr.f32.mxu0 0.0
          %650 = vmatmul.mubr.f32.gmra.mrb[0].mxu0 %v476
          %v651 = vpop.f32.mrb[0].mxu0
          %v652 = vadd.f32 %v299, %v651
          %v653 = vpop.f32.mrb[0].mxu0
          %654 = vmatprep.mubr.f32.mxu0 0.0
          %655 = vmatmul.mubr.f32.gmra.mrb[0].mxu0 %v479
          %v656 = vpop.f32.mrb[0].mxu0
          %v657 = vadd.f32 %v304, %v656
          %v658 = vpop.f32.mrb[0].mxu0
          %659 = vmatprep.mubr.f32.mxu0 0.0
          %660 = vmatmul.mubr.f32.gmra.mrb[0].mxu0 %v482
          %v661 = vpop.f32.mrb[0].mxu0
          %v662 = vadd.f32 %v309, %v661
          %v663 = vpop.f32.mrb[0].mxu0
          %664 = vmatprep.mubr.f32.mxu0 0.0
          %665 = vmatmul.mubr.f32.gmra.mrb[0].mxu0 %v485
          %v666 = vpop.f32.mrb[0].mxu0
          %v667 = vadd.f32 %v314, %v666
          %v668 = vpop.f32.mrb[0].mxu0
          %669 = vmatprep.mubr.f32.mxu0 0.0
          %670 = vmatmul.mubr.f32.gmra.mrb[0].mxu0 %v488
          %v671 = vpop.f32.mrb[0].mxu0
          %v672 = vadd.f32 %v319, %v671
          %v673 = vpop.f32.mrb[0].mxu0
          %674 = vmatprep.mubr.f32.mxu0 0.0
          %675 = vmatmul.mubr.f32.gmra.mrb[0].mxu0 %v491
          %v676 = vpop.f32.mrb[0].mxu0
          %v677 = vadd.f32 %v324, %v676
          %v678 = vpop.f32.mrb[0].mxu0
          %679 = vmatprep.mubr.f32.mxu0 0.0
          %680 = vmatmul.mubr.f32.gmra.mrb[0].mxu0 %v494
          %v681 = vpop.f32.mrb[0].mxu0
          %v682 = vadd.f32 %v329, %v681
          %v683 = vpop.f32.mrb[0].mxu0
          %684 = vmatprep.mubr.f32.mxu0 0.0
          %685 = vmatmul.mubr.f32.gmra.mrb[0].mxu0 %v497
          %v686 = vpop.f32.mrb[0].mxu0
          %v687 = vadd.f32 %v334, %v686
          %v688 = vpop.f32.mrb[0].mxu0
          %689 = vmatprep.mubr.f32.mxu0 0.0
          %690 = vmatmul.mubr.f32.gmra.mrb[0].mxu0 %v500
          %v691 = vpop.f32.mrb[0].mxu0
          %v692 = vadd.f32 %v339, %v691
          %v693 = vpop.f32.mrb[0].mxu0
          %694 = vmatprep.mubr.f32.mxu0 0.0
          %695 = vmatmul.mubr.f32.gmra.mrb[0].mxu0 %v503
          %v696 = vpop.f32.mrb[0].mxu0
          %v697 = vadd.f32 %v344, %v696
          %v698 = vpop.f32.mrb[0].mxu0
          %699 = vmatprep.mubr.f32.mxu0 0.0
          %700 = vmatmul.mubr.f32.gmra.mrb[0].mxu0 %v506
          %v701 = vpop.f32.mrb[0].mxu0
          %v702 = vadd.f32 %v349, %v701
          %v703 = vpop.f32.mrb[0].mxu0
          %704 = vmatprep.mubr.f32.mxu0 0.0
          %705 = vmatmul.mubr.f32.gmra.mrb[0].mxu0 %v509
          %v706 = vpop.f32.mrb[0].mxu0
          %v707 = vadd.f32 %v354, %v706
          %v708 = vpop.f32.mrb[0].mxu0
          %709 = vmatprep.mubr.f32.mxu0 0.0
          %710 = vmatmul.mubr.f32.gmra.mrb[0].mxu0 %v512
          %v711 = vpop.f32.mrb[0].mxu0
          %v712 = vadd.f32 %v359, %v711
          %v713 = vpop.f32.mrb[0].mxu0
          %714 = vmatprep.mubr.f32.mxu0 0.0
          %715 = vmatmul.mubr.f32.gmra.mrb[0].mxu0 %v515
          %v716 = vpop.f32.mrb[0].mxu0
          %v717 = vadd.f32 %v364, %v716
          %v718 = vpop.f32.mrb[0].mxu0
          %719 = vmatprep.mubr.f32.mxu0 0.0
          %720 = vmatmul.mubr.f32.gmra.mrb[0].mxu0 %v518
          %v721 = vpop.f32.mrb[0].mxu0
          %v722 = vadd.f32 %v369, %v721
          %v723 = vpop.f32.mrb[0].mxu0
          %724 = vmatprep.mubr.f32.mxu0 0.0
          %725 = vmatmul.mubr.f32.gmra.mrb[0].mxu0 %v521
          %v726 = vpop.f32.mrb[0].mxu0
          %v727 = vadd.f32 %v374, %v726
          %v728 = vpop.f32.mrb[0].mxu0
          %729 = vmatprep.mubr.f32.mxu0 0.0
          %730 = vmatmul.mubr.f32.gmra.mrb[0].mxu0 %v524
          %v731 = vpop.f32.mrb[0].mxu0
          %v732 = vadd.f32 %v379, %v731
          %v733 = vpop.f32.mrb[0].mxu0
          %734 = vmatprep.mubr.f32.mxu0 0.0
          %735 = vmatmul.mubr.f32.gmra.mrb[0].mxu0 %v527
          %v736 = vpop.f32.mrb[0].mxu0
          %v737 = vadd.f32 %v384, %v736
          %v738 = vpop.f32.mrb[0].mxu0
          %739 = vmatprep.mubr.f32.mxu0 0.0
          %740 = vmatmul.mubr.f32.gmra.mrb[0].mxu0 %v530
          %v741 = vpop.f32.mrb[0].mxu0
          %v742 = vadd.f32 %v389, %v741
          %v743 = vpop.f32.mrb[0].mxu0
          %744 = vmatprep.mubr.f32.mxu0 0.0
          %745 = vmatmul.mubr.f32.gmra.mrb[0].mxu0 %v533
          %v746 = vpop.f32.mrb[0].mxu0
          %v747 = vadd.f32 %v394, %v746
          %v748 = vpop.f32.mrb[0].mxu0
          %749 = vmatprep.mubr.f32.mxu0 0.0
          %750 = vmatmul.mubr.f32.gmra.mrb[0].mxu0 %v536
          %v751 = vpop.f32.mrb[0].mxu0
          %v752 = vadd.f32 %v399, %v751
          %v753 = vpop.f32.mrb[0].mxu0
          %754 = vmatprep.mubr.f32.mxu0 0.0
          %755 = vmatmul.mubr.f32.gmra.mrb[0].mxu0 %v539
          %v756 = vpop.f32.mrb[0].mxu0
          %v757 = vadd.f32 %v404, %v756
          %v758 = vpop.f32.mrb[0].mxu0
          %759 = vmatprep.mubr.f32.mxu0 0.0
          %760 = vmatmul.mubr.f32.gmra.mrb[0].mxu0 %v542
          %v761 = vpop.f32.mrb[0].mxu0
          %v762 = vadd.f32 %v409, %v761
          %v763 = vpop.f32.mrb[0].mxu0
          %764 = vmatprep.mubr.f32.mxu0 0.0
          %765 = vmatmul.mubr.f32.gmra.mrb[0].mxu0 %v545
          %v766 = vpop.f32.mrb[0].mxu0
          %v767 = vadd.f32 %v414, %v766
          %v768 = vpop.f32.mrb[0].mxu0
          %769 = vmatprep.mubr.f32.mxu0 0.0
          %770 = vmatmul.mubr.f32.gmra.mrb[0].mxu0 %v548
          %v771 = vpop.f32.mrb[0].mxu0
          %v772 = vadd.f32 %v419, %v771
          %v773 = vpop.f32.mrb[0].mxu0
          %774 = vmatprep.mubr.f32.mxu0 0.0
          %775 = vmatmul.mubr.f32.gmra.mrb[0].mxu0 %v551
          %v776 = vpop.f32.mrb[0].mxu0
          %v777 = vadd.f32 %v424, %v776
          %v778 = vpop.f32.mrb[0].mxu0
          %779 = vmatprep.mubr.f32.mxu0 0.0
          %780 = vmatmul.mubr.f32.gmra.mrb[0].mxu0 %v554
          %v781 = vpop.f32.mrb[0].mxu0
          %v782 = vadd.f32 %v429, %v781
          %v783 = vpop.f32.mrb[0].mxu0
          %784 = vmatprep.mubr.f32.mxu0 0.0
          %785 = vmatmul.mubr.f32.gmra.mrb[0].mxu0 %v557
          %v786 = vpop.f32.mrb[0].mxu0
          %v787 = vadd.f32 %v434, %v786
          %v788 = vpop.f32.mrb[0].mxu0
          %789 = vmatprep.mubr.f32.mxu0 0.0
          %790 = vmatmul.mubr.f32.gmra.mrb[0].mxu0 %v560
          %v791 = vpop.f32.mrb[0].mxu0
          %v792 = vadd.f32 %v439, %v791
          %v793 = vpop.f32.mrb[0].mxu0
          %794 = vmatprep.mubr.f32.mxu0 0.0
          %795 = vmatmul.mubr.f32.gmra.mrb[0].mxu0 %v563
          %v796 = vpop.f32.mrb[0].mxu0
          %v797 = vadd.f32 %v444, %v796
          %v798 = vpop.f32.mrb[0].mxu0
          %799 = vmatprep.mubr.f32.mxu0 0.0
          %800 = vmatmul.mubr.f32.gmra.mrb[0].mxu0 %v566
          %v801 = vpop.f32.mrb[0].mxu0
          %v802 = vadd.f32 %v449, %v801
          %v803 = vpop.f32.mrb[0].mxu0
          %804 = vmatprep.mubr.f32.mxu0 0.0
          %805 = vmatmul.mubr.f32.gmra.mrb[0].mxu0 %v569
          %v806 = vpop.f32.mrb[0].mxu0
          %v807 = vadd.f32 %v454, %v806
          %v808 = vpop.f32.mrb[0].mxu0
          %809 = vmatprep.mubr.f32.mxu0 0.0
          %810 = vmatmul.mubr.f32.gmra.mrb[0].mxu0 %v572
          %v811 = vpop.f32.mrb[0].mxu0
          %v812 = vadd.f32 %v459, %v811
          %v813 = vpop.f32.mrb[0].mxu0
          %814 = vmatprep.mubr.f32.mxu0 0.0
          %815 = vmatmul.mubr.f32.gmra.mrb[0].mxu0 %v575
          %v816 = vpop.f32.mrb[0].mxu0
          %v817 = vadd.f32 %v464, %v816
          %v818 = vpop.f32.mrb[0].mxu0
          %819 = vmatprep.mubr.f32.mxu0 0.0
          %820 = vmatmul.mubr.f32.gmra.mrb[0].mxu0 %v578
          %v821 = vpop.f32.mrb[0].mxu0
          %v822 = vadd.f32 %v469, %v821
          %v823 = vpop.f32.mrb[0].mxu0
          %824 = vdwg.mxu0
          %vm825 = vcmask 523264
          %826 = vst.msk [vmem:[#allocation2] sm:$0xff] %vm825, %v647
          %827 = vst.msk [vmem:[#allocation2 + $0x8] sm:$0xff] %vm825, %v652
          %828 = vst.msk [vmem:[#allocation2 + $0x10] sm:$0xff] %vm825, %v657
          %829 = vst.msk [vmem:[#allocation2 + $0x18] sm:$0xff] %vm825, %v662
          %830 = vst.msk [vmem:[#allocation2 + $0x20] sm:$0xff] %vm825, %v667
          %831 = vst.msk [vmem:[#allocation2 + $0x28] sm:$0xff] %vm825, %v672
          %832 = vst.msk [vmem:[#allocation2 + $0x30] sm:$0xff] %vm825, %v677
          %833 = vst.msk [vmem:[#allocation2 + $0x38] sm:$0xff] %vm825, %v682
          %834 = vst.msk [vmem:[#allocation2 + $0x40] sm:$0xff] %vm825, %v687
          %835 = vst.msk [vmem:[#allocation2 + $0x48] sm:$0xff] %vm825, %v692
          %836 = vst.msk [vmem:[#allocation2 + $0x50] sm:$0xff] %vm825, %v697
          %837 = vst.msk [vmem:[#allocation2 + $0x58] sm:$0xff] %vm825, %v702
          %838 = vst.msk [vmem:[#allocation2 + $0x60] sm:$0xff] %vm825, %v707
          %839 = vst.msk [vmem:[#allocation2 + $0x68] sm:$0xff] %vm825, %v712
          %840 = vst.msk [vmem:[#allocation2 + $0x70] sm:$0xff] %vm825, %v717
          %841 = vst.msk [vmem:[#allocation2 + $0x78] sm:$0xff] %vm825, %v722
          %842 = vst.msk [vmem:[#allocation2 + $0x80] sm:$0xff] %vm825, %v727
          %843 = vst.msk [vmem:[#allocation2 + $0x88] sm:$0xff] %vm825, %v732
          %844 = vst.msk [vmem:[#allocation2 + $0x90] sm:$0xff] %vm825, %v737
          %845 = vst.msk [vmem:[#allocation2 + $0x98] sm:$0xff] %vm825, %v742
          %846 = vst.msk [vmem:[#allocation2 + $0xa0] sm:$0xff] %vm825, %v747
          %847 = vst.msk [vmem:[#allocation2 + $0xa8] sm:$0xff] %vm825, %v752
          %848 = vst.msk [vmem:[#allocation2 + $0xb0] sm:$0xff] %vm825, %v757
          %849 = vst.msk [vmem:[#allocation2 + $0xb8] sm:$0xff] %vm825, %v762
          %850 = vst.msk [vmem:[#allocation2 + $0xc0] sm:$0xff] %vm825, %v767
          %851 = vst.msk [vmem:[#allocation2 + $0xc8] sm:$0xff] %vm825, %v772
          %852 = vst.msk [vmem:[#allocation2 + $0xd0] sm:$0xff] %vm825, %v777
          %853 = vst.msk [vmem:[#allocation2 + $0xd8] sm:$0xff] %vm825, %v782
          %854 = vst.msk [vmem:[#allocation2 + $0xe0] sm:$0xff] %vm825, %v787
          %855 = vst.msk [vmem:[#allocation2 + $0xe8] sm:$0xff] %vm825, %v792
          %856 = vst.msk [vmem:[#allocation2 + $0xf0] sm:$0xff] %vm825, %v797
          %857 = vst.msk [vmem:[#allocation2 + $0xf8] sm:$0xff] %vm825, %v802
          %858 = vst.msk [vmem:[#allocation2 + $0x100] sm:$0xff] %vm825, %v807
          %859 = vst.msk [vmem:[#allocation2 + $0x108] sm:$0xff] %vm825, %v812
          %860 = vst.msk [vmem:[#allocation2 + $0x110] sm:$0xff] %vm825, %v817
          %861 = vst.msk [vmem:[#allocation2 + $0x118] sm:$0xff] %vm825, %v822
        $region40: #{tpu_custom_call.1} parent=35 // pred_fallthru
          _
        %v862 = vld [vmem:[#allocation2] sm:$0xff]
        %v863 = vld [vmem:[#allocation2 + $0x8] sm:$0xff]
        %v864 = vld [vmem:[#allocation2 + $0x10] sm:$0xff]
        %v865 = vld [vmem:[#allocation2 + $0x18] sm:$0xff]
        %v866 = vld [vmem:[#allocation2 + $0x20] sm:$0xff]
        %v867 = vld [vmem:[#allocation2 + $0x28] sm:$0xff]
        %v868 = vld [vmem:[#allocation2 + $0x30] sm:$0xff]
        %v869 = vld [vmem:[#allocation2 + $0x38] sm:$0xff]
        %v870 = vld [vmem:[#allocation2 + $0x40] sm:$0xff]
        %v871 = vld [vmem:[#allocation2 + $0x48] sm:$0xff]
        %v872 = vld [vmem:[#allocation2 + $0x50] sm:$0xff]
        %v873 = vld [vmem:[#allocation2 + $0x58] sm:$0xff]
        %v874 = vld [vmem:[#allocation2 + $0x60] sm:$0xff]
        %v875 = vld [vmem:[#allocation2 + $0x68] sm:$0xff]
        %v876 = vld [vmem:[#allocation2 + $0x70] sm:$0xff]
        %v877 = vld [vmem:[#allocation2 + $0x78] sm:$0xff]
        %v878 = vld [vmem:[%s210] sm:$0xff]
        %v879 = vld [vmem:[%s210 + $0x8] sm:$0xff]
        %v880 = vld [vmem:[%s210 + $0x10] sm:$0xff]
        %v881 = vld [vmem:[%s210 + $0x18] sm:$0xff]
        %v882 = vld [vmem:[#allocation2 + $0x80] sm:$0xff]
        %v883 = vld [vmem:[#allocation2 + $0x88] sm:$0xff]
        %v884 = vld [vmem:[#allocation2 + $0x90] sm:$0xff]
        %v885 = vld [vmem:[#allocation2 + $0x98] sm:$0xff]
        %v886 = vld [vmem:[#allocation2 + $0xa0] sm:$0xff]
        %v887 = vld [vmem:[#allocation2 + $0xa8] sm:$0xff]
        %v888 = vld [vmem:[#allocation2 + $0xb0] sm:$0xff]
        %v889 = vld [vmem:[#allocation2 + $0xb8] sm:$0xff]
        %v890 = vld [vmem:[#allocation2 + $0xc0] sm:$0xff]
        %v891 = vld [vmem:[#allocation2 + $0xc8] sm:$0xff]
        %v892 = vld [vmem:[#allocation2 + $0xd0] sm:$0xff]
        %v893 = vld [vmem:[#allocation2 + $0xd8] sm:$0xff]
        %v894 = vld [vmem:[#allocation2 + $0xe0] sm:$0xff]
        %v895 = vld [vmem:[#allocation2 + $0xe8] sm:$0xff]
        %v896 = vld [vmem:[#allocation2 + $0xf0] sm:$0xff]
        %v897 = vld [vmem:[#allocation2 + $0xf8] sm:$0xff]
        %v898 = vld [vmem:[#allocation2 + $0x100] sm:$0xff]
        %v899 = vld [vmem:[#allocation2 + $0x108] sm:$0xff]
        %v900 = vld [vmem:[#allocation2 + $0x110] sm:$0xff]
        %v901 = vld [vmem:[#allocation2 + $0x118] sm:$0xff]
        %902 = vxpose.xlu0.b32.start [1/16] %v862, 128
        %903 = vxpose.xlu0.b32.cont [2/16] %v863, 128
        %904 = vxpose.xlu0.b32.cont [3/16] %v864, 128
        %905 = vxpose.xlu0.b32.cont [4/16] %v865, 128
        %906 = vxpose.xlu0.b32.cont [5/16] %v866, 128
        %907 = vxpose.xlu0.b32.cont [6/16] %v867, 128
        %908 = vxpose.xlu0.b32.cont [7/16] %v868, 128
        %909 = vxpose.xlu0.b32.cont [8/16] %v869, 128
        %910 = vxpose.xlu0.b32.cont [9/16] %v870, 128
        %911 = vxpose.xlu0.b32.cont [10/16] %v871, 128
        %912 = vxpose.xlu0.b32.cont [11/16] %v872, 128
        %913 = vxpose.xlu0.b32.cont [12/16] %v873, 128
        %914 = vxpose.xlu0.b32.cont [13/16] %v874, 128
        %915 = vxpose.xlu0.b32.cont [14/16] %v875, 128
        %916 = vxpose.xlu0.b32.cont [15/16] %v876, 128
        %917 = vxpose.xlu0.b32.end [16/16] %v877, 128
        %v918 = vpop.trf.xlu0
        %v919 = vpop.trf.xlu0
        %v920 = vpop.trf.xlu0
        %v921 = vpop.trf.xlu0
        %v922 = vpop.trf.xlu0
        %v923 = vpop.trf.xlu0
        %v924 = vpop.trf.xlu0
        %v925 = vpop.trf.xlu0
        %v926 = vpop.trf.xlu0
        %v927 = vpop.trf.xlu0
        %v928 = vpop.trf.xlu0
        %v929 = vpop.trf.xlu0
        %v930 = vpop.trf.xlu0
        %v931 = vpop.trf.xlu0
        %v932 = vpop.trf.xlu0
        %v933 = vpop.trf.xlu0
        %934 = vmatprep.subr.mxu0 0.0
        %935 = vmatpush1.msra.mxu0 %v882
        %936 = vmatprep.subr.mxu0 0.0
        %937 = vmatpush1.msra.mxu0 %v883
        %938 = vmatprep.subr.mxu0 0.0
        %939 = vmatpush1.msra.mxu0 %v884
        %940 = vmatprep.subr.mxu0 0.0
        %941 = vmatpush1.msra.mxu0 %v885
        %942 = vmatprep.subr.mxu0 0.0
        %943 = vmatpush1.msra.mxu0 %v886
        %944 = vmatprep.subr.mxu0 0.0
        %945 = vmatpush1.msra.mxu0 %v887
        %946 = vmatprep.subr.mxu0 0.0
        %947 = vmatpush1.msra.mxu0 %v888
        %948 = vmatprep.subr.mxu0 0.0
        %949 = vmatpush1.msra.mxu0 %v889
        %950 = vmatprep.subr.mxu0 0.0
        %951 = vmatpush1.msra.mxu0 %v890
        %952 = vmatprep.subr.mxu0 0.0
        %953 = vmatpush1.msra.mxu0 %v891
        %954 = vmatprep.subr.mxu0 0.0
        %955 = vmatpush1.msra.mxu0 %v892
        %956 = vmatprep.subr.mxu0 0.0
        %957 = vmatpush1.msra.mxu0 %v893
        %958 = vmatprep.subr.mxu0 0.0
        %959 = vmatpush1.msra.mxu0 %v894
        %960 = vmatprep.subr.mxu0 0.0
        %961 = vmatpush1.msra.mxu0 %v895
        %962 = vmatprep.subr.mxu0 0.0
        %963 = vmatpush1.msra.mxu0 %v896
        %964 = vmatprep.subr.mxu0 0.0
        %965 = vmatpush1.msra.mxu0 %v897
        %966 = vmatprep.subr.mxu0 0.0
        %967 = vmatpush1.msra.mxu0 0.0
        %968 = vmatprep.subr.mxu0 0.0
        %969 = vmatpush1.msra.mxu0 0.0
        %970 = vmatprep.subr.mxu0 0.0
        %971 = vmatpush1.msra.mxu0 0.0
        %972 = vmatprep.subr.mxu0 0.0
        %973 = vmatpush1.msra.mxu0 0.0
        %974 = vmatprep.subr.mxu0 0.0
        %975 = vmatpush1.msra.mxu0 0.0
        %976 = vmatprep.subr.mxu0 0.0
        %977 = vmatpush1.msra.mxu0 0.0
        %978 = vmatprep.subr.mxu0 0.0
        %979 = vmatpush1.msra.mxu0 0.0
        %980 = vmatprep.subr.mxu0 0.0
        %981 = vmatpush1.msra.mxu0 0.0
        %982 = vmatprep.subr.mxu0 0.0
        %983 = vmatpush1.msra.mxu0 0.0
        %984 = vmatprep.subr.mxu0 0.0
        %985 = vmatpush1.msra.mxu0 0.0
        %986 = vmatprep.subr.mxu0 0.0
        %987 = vmatpush1.msra.mxu0 0.0
        %988 = vmatprep.subr.mxu0 0.0
        %989 = vmatpush1.msra.mxu0 0.0
        %990 = vmatprep.subr.mxu0 0.0
        %991 = vmatpush1.msra.mxu0 0.0
        %992 = vmatprep.subr.mxu0 0.0
        %993 = vmatpush1.msra.mxu0 0.0
        %994 = vmatprep.subr.mxu0 0.0
        %995 = vmatpush1.msra.mxu0 0.0
        %996 = vmatprep.subr.mxu0 0.0
        %997 = vmatpush1.msra.mxu0 0.0
        %998 = vmatprep.mubr.f32.mxu0 0.0
        %999 = vmatmul.mubr.f32.gmra.mrb[0].mxu0 %v918
        %v1000 = vpop.f32.mrb[0].mxu0
        %v1001 = vadd.f32 0.0, %v1000
        %v1002 = vpop.f32.mrb[0].mxu0
        %1003 = vmatprep.mubr.f32.mxu0 0.0
        %1004 = vmatmul.mubr.f32.gmra.mrb[0].mxu0 %v919
        %v1005 = vpop.f32.mrb[0].mxu0
        %v1006 = vadd.f32 0.0, %v1005
        %v1007 = vpop.f32.mrb[0].mxu0
        %1008 = vmatprep.mubr.f32.mxu0 0.0
        %1009 = vmatmul.mubr.f32.gmra.mrb[0].mxu0 %v920
        %v1010 = vpop.f32.mrb[0].mxu0
        %v1011 = vadd.f32 0.0, %v1010
        %v1012 = vpop.f32.mrb[0].mxu0
        %1013 = vmatprep.mubr.f32.mxu0 0.0
        %1014 = vmatmul.mubr.f32.gmra.mrb[0].mxu0 %v921
        %v1015 = vpop.f32.mrb[0].mxu0
        %v1016 = vadd.f32 0.0, %v1015
        %v1017 = vpop.f32.mrb[0].mxu0
        %1018 = vmatprep.mubr.f32.mxu0 0.0
        %1019 = vmatmul.mubr.f32.gmra.mrb[0].mxu0 %v922
        %v1020 = vpop.f32.mrb[0].mxu0
        %v1021 = vadd.f32 0.0, %v1020
        %v1022 = vpop.f32.mrb[0].mxu0
        %1023 = vmatprep.mubr.f32.mxu0 0.0
        %1024 = vmatmul.mubr.f32.gmra.mrb[0].mxu0 %v923
        %v1025 = vpop.f32.mrb[0].mxu0
        %v1026 = vadd.f32 0.0, %v1025
        %v1027 = vpop.f32.mrb[0].mxu0
        %1028 = vmatprep.mubr.f32.mxu0 0.0
        %1029 = vmatmul.mubr.f32.gmra.mrb[0].mxu0 %v924
        %v1030 = vpop.f32.mrb[0].mxu0
        %v1031 = vadd.f32 0.0, %v1030
        %v1032 = vpop.f32.mrb[0].mxu0
        %1033 = vmatprep.mubr.f32.mxu0 0.0
        %1034 = vmatmul.mubr.f32.gmra.mrb[0].mxu0 %v925
        %v1035 = vpop.f32.mrb[0].mxu0
        %v1036 = vadd.f32 0.0, %v1035
        %v1037 = vpop.f32.mrb[0].mxu0
        %1038 = vdwg.mxu0
        %vm1039 = vcmask 523264
        %v1040 = vsel %vm1039, %v1001, -inf
        %1041 = vmax.xlane.f32.xlu0 %v1040
        %v1042 = vpop.xlane.xlu0 %1041
        %v1043 = vsel %vm1039, %v1006, -inf
        %1044 = vmax.xlane.f32.xlu0 %v1043
        %v1045 = vpop.xlane.xlu0 %1044
        %v1046 = vsel %vm1039, %v1011, -inf
        %1047 = vmax.xlane.f32.xlu0 %v1046
        %v1048 = vpop.xlane.xlu0 %1047
        %v1049 = vsel %vm1039, %v1016, -inf
        %1050 = vmax.xlane.f32.xlu0 %v1049
        %v1051 = vpop.xlane.xlu0 %1050
        %v1052 = vsel %vm1039, %v1021, -inf
        %1053 = vmax.xlane.f32.xlu0 %v1052
        %v1054 = vpop.xlane.xlu0 %1053
        %v1055 = vsel %vm1039, %v1026, -inf
        %1056 = vmax.xlane.f32.xlu0 %v1055
        %v1057 = vpop.xlane.xlu0 %1056
        %v1058 = vsel %vm1039, %v1031, -inf
        %1059 = vmax.xlane.f32.xlu0 %v1058
        %v1060 = vpop.xlane.xlu0 %1059
        %v1061 = vsel %vm1039, %v1036, -inf
        %1062 = vmax.xlane.f32.xlu0 %v1061
        %v1063 = vpop.xlane.xlu0 %1062
        %v1064 = vsub.f32 %v1001, %v1042
        %v1065 = vsub.f32 %v1006, %v1045
        %v1066 = vsub.f32 %v1011, %v1048
        %v1067 = vsub.f32 %v1016, %v1051
        %v1068 = vsub.f32 %v1021, %v1054
        %v1069 = vsub.f32 %v1026, %v1057
        %v1070 = vsub.f32 %v1031, %v1060
        %v1071 = vsub.f32 %v1036, %v1063
        %v1072 = vmul.f32 %v1064, 1.442695
        %v1073 = vpow.pop %v1072
        %v1074 = vmul.f32 %v1065, 1.442695
        %v1075 = vpow.pop %v1074
        %v1076 = vmul.f32 %v1066, 1.442695
        %v1077 = vpow.pop %v1076
        %v1078 = vmul.f32 %v1067, 1.442695
        %v1079 = vpow.pop %v1078
        %v1080 = vmul.f32 %v1068, 1.442695
        %v1081 = vpow.pop %v1080
        %v1082 = vmul.f32 %v1069, 1.442695
        %v1083 = vpow.pop %v1082
        %v1084 = vmul.f32 %v1070, 1.442695
        %v1085 = vpow.pop %v1084
        %v1086 = vmul.f32 %v1071, 1.442695
        %v1087 = vpow.pop %v1086
        %v1088 = vsel %vm1039, %v1073, 0.0
        %1089 = vadd.xlane.f32.xlu0 %v1088
        %v1090 = vpop.xlane.xlu0 %1089
        %v1091 = vsel %vm1039, %v1075, 0.0
        %1092 = vadd.xlane.f32.xlu0 %v1091
        %v1093 = vpop.xlane.xlu0 %1092
        %v1094 = vsel %vm1039, %v1077, 0.0
        %1095 = vadd.xlane.f32.xlu0 %v1094
        %v1096 = vpop.xlane.xlu0 %1095
        %v1097 = vsel %vm1039, %v1079, 0.0
        %1098 = vadd.xlane.f32.xlu0 %v1097
        %v1099 = vpop.xlane.xlu0 %1098
        %v1100 = vsel %vm1039, %v1081, 0.0
        %1101 = vadd.xlane.f32.xlu0 %v1100
        %v1102 = vpop.xlane.xlu0 %1101
        %v1103 = vsel %vm1039, %v1083, 0.0
        %1104 = vadd.xlane.f32.xlu0 %v1103
        %v1105 = vpop.xlane.xlu0 %1104
        %v1106 = vsel %vm1039, %v1085, 0.0
        %1107 = vadd.xlane.f32.xlu0 %v1106
        %v1108 = vpop.xlane.xlu0 %1107
        %v1109 = vsel %vm1039, %v1087, 0.0
        %1110 = vadd.xlane.f32.xlu0 %v1109
        %v1111 = vpop.xlane.xlu0 %1110
        %v1112 = vrcp.pop %v1090
        %v1113 = vrcp.pop %v1093
        %v1114 = vrcp.pop %v1096
        %v1115 = vrcp.pop %v1099
        %v1116 = vrcp.pop %v1102
        %v1117 = vrcp.pop %v1105
        %v1118 = vrcp.pop %v1108
        %v1119 = vrcp.pop %v1111
        %v1120 = vmul.f32 %v1073, %v1112
        %v1121 = vmul.f32 %v1075, %v1113
        %v1122 = vmul.f32 %v1077, %v1114
        %v1123 = vmul.f32 %v1079, %v1115
        %v1124 = vmul.f32 %v1081, %v1116
        %v1125 = vmul.f32 %v1083, %v1117
        %v1126 = vmul.f32 %v1085, %v1118
        %v1127 = vmul.f32 %v1087, %v1119
        %v1129 = vsel %vm1039, %v898, 0
        %v1132 = vsel %vm1039, %v899, 0
        %v1135 = vsel %vm1039, %v900, 0
        %v1138 = vsel %vm1039, %v901, 0
        %v1141 = vsel %vm1039, %v1120, 0
        %v1144 = vsel %vm1039, %v1121, 0
        %v1147 = vsel %vm1039, %v1122, 0
        %v1150 = vsel %vm1039, %v1123, 0
        %v1153 = vsel %vm1039, %v1124, 0
        %v1156 = vsel %vm1039, %v1125, 0
        %v1159 = vsel %vm1039, %v1126, 0
        %v1162 = vsel %vm1039, %v1127, 0
        %1164 = vmatprep.subr.mxu0 0.0
        %1165 = vmatpush1.xpose.msra.mxu0 %v1141
        %1166 = vmatprep.subr.mxu0 0.0
        %1167 = vmatpush1.xpose.msra.mxu0 %v1144
        %1168 = vmatprep.subr.mxu0 0.0
        %1169 = vmatpush1.xpose.msra.mxu0 %v1147
        %1170 = vmatprep.subr.mxu0 0.0
        %1171 = vmatpush1.xpose.msra.mxu0 %v1150
        %1172 = vmatprep.subr.mxu0 0.0
        %1173 = vmatpush1.xpose.msra.mxu0 %v1153
        %1174 = vmatprep.subr.mxu0 0.0
        %1175 = vmatpush1.xpose.msra.mxu0 %v1156
        %1176 = vmatprep.subr.mxu0 0.0
        %1177 = vmatpush1.xpose.msra.mxu0 %v1159
        %1178 = vmatprep.subr.mxu0 0.0
        %1179 = vmatpush1.xpose.msra.mxu0 %v1162
        %1180 = vmatprep.subr.mxu0 0.0
        %1181 = vmatpush1.xpose.msra.mxu0 0.0
        %1182 = vmatprep.subr.mxu0 0.0
        %1183 = vmatpush1.xpose.msra.mxu0 0.0
        %1184 = vmatprep.subr.mxu0 0.0
        %1185 = vmatpush1.xpose.msra.mxu0 0.0
        %1186 = vmatprep.subr.mxu0 0.0
        %1187 = vmatpush1.xpose.msra.mxu0 0.0
        %1188 = vmatprep.subr.mxu0 0.0
        %1189 = vmatpush1.xpose.msra.mxu0 0.0
        %1190 = vmatprep.subr.mxu0 0.0
        %1191 = vmatpush1.xpose.msra.mxu0 0.0
        %1192 = vmatprep.subr.mxu0 0.0
        %1193 = vmatpush1.xpose.msra.mxu0 0.0
        %1194 = vmatprep.subr.mxu0 0.0
        %1195 = vmatpush1.xpose.msra.mxu0 0.0
        %1196 = vmatprep.subr.mxu0 0.0
        %1197 = vmatpush1.xpose.msra.mxu0 0.0
        %1198 = vmatprep.subr.mxu0 0.0
        %1199 = vmatpush1.xpose.msra.mxu0 0.0
        %1200 = vmatprep.subr.mxu0 0.0
        %1201 = vmatpush1.xpose.msra.mxu0 0.0
        %1202 = vmatprep.subr.mxu0 0.0
        %1203 = vmatpush1.xpose.msra.mxu0 0.0
        %1204 = vmatprep.subr.mxu0 0.0
        %1205 = vmatpush1.xpose.msra.mxu0 0.0
        %1206 = vmatprep.subr.mxu0 0.0
        %1207 = vmatpush1.xpose.msra.mxu0 0.0
        %1208 = vmatprep.subr.mxu0 0.0
        %1209 = vmatpush1.xpose.msra.mxu0 0.0
        %1210 = vmatprep.subr.mxu0 0.0
        %1211 = vmatpush1.xpose.msra.mxu0 0.0
        %1212 = vmatprep.subr.mxu0 0.0
        %1213 = vmatpush1.xpose.msra.mxu0 0.0
        %1214 = vmatprep.subr.mxu0 0.0
        %1215 = vmatpush1.xpose.msra.mxu0 0.0
        %1216 = vmatprep.subr.mxu0 0.0
        %1217 = vmatpush1.xpose.msra.mxu0 0.0
        %1218 = vmatprep.subr.mxu0 0.0
        %1219 = vmatpush1.xpose.msra.mxu0 0.0
        %1220 = vmatprep.subr.mxu0 0.0
        %1221 = vmatpush1.xpose.msra.mxu0 0.0
        %1222 = vmatprep.subr.mxu0 0.0
        %1223 = vmatpush1.xpose.msra.mxu0 0.0
        %1224 = vmatprep.subr.mxu0 0.0
        %1225 = vmatpush1.xpose.msra.mxu0 0.0
        %1226 = vmatprep.subr.mxu0 0.0
        %1227 = vmatpush1.xpose.msra.mxu0 0.0
        %1228 = vmatprep.mubr.f32.mxu0 0.0
        %1229 = vmatmul.mubr.f32.gmra.mrb[0].mxu0 %v1129
        %v1230 = vpop.f32.mrb[0].mxu0
        %v1231 = vadd.f32 0.0, %v1230
        %v1232 = vpop.f32.mrb[0].mxu0
        %1233 = vmatprep.mubr.f32.mxu0 0.0
        %1234 = vmatmul.mubr.f32.gmra.mrb[0].mxu0 %v1132
        %v1235 = vpop.f32.mrb[0].mxu0
        %v1236 = vadd.f32 0.0, %v1235
        %v1237 = vpop.f32.mrb[0].mxu0
        %1238 = vmatprep.mubr.f32.mxu0 0.0
        %1239 = vmatmul.mubr.f32.gmra.mrb[0].mxu0 %v1135
        %v1240 = vpop.f32.mrb[0].mxu0
        %v1241 = vadd.f32 0.0, %v1240
        %v1242 = vpop.f32.mrb[0].mxu0
        %1243 = vmatprep.mubr.f32.mxu0 0.0
        %1244 = vmatmul.mubr.f32.gmra.mrb[0].mxu0 %v1138
        %v1245 = vpop.f32.mrb[0].mxu0
        %v1246 = vadd.f32 0.0, %v1245
        %v1247 = vpop.f32.mrb[0].mxu0
        %1248 = vdwg.mxu0
        %s1249 = sld [smem:[#allocation3]]
        %v1250 = vstv %s1249
        %v1251 = vmul.f32 %v1250, %v1231
        %v1252 = vmul.f32 %v1250, %v1236
        %v1253 = vmul.f32 %v1250, %v1241
        %v1254 = vmul.f32 %v1250, %v1246
        %v1255 = vadd.f32 %v1251, %v878
        %v1256 = vadd.f32 %v1252, %v879
        %v1257 = vadd.f32 %v1253, %v880
        %v1258 = vadd.f32 %v1254, %v881
        %1259 = vst.msk [vmem:[%s205] sm:$0xff] %vm1039, %v1255
        %1260 = vst.msk [vmem:[%s205 + $0x8] sm:$0xff] %vm1039, %v1256
        %1261 = vst.msk [vmem:[%s205 + $0x10] sm:$0xff] %vm1039, %v1257
        %1262 = vst.msk [vmem:[%s205 + $0x18] sm:$0xff] %vm1039, %v1258
        %s1263 = sand.u32 %s130, 1
        %s1264 = scalar_lea.sflag [#allocation5], %s1263
        %s1265 = sand.u32 %s130, 1
        %s1266 = smul.addr %s1265, 32
        %s1267 = scalar_lea.vmem [#allocation4], %s1266
        // Predicated region
        $region41: #{tpu_custom_call.1} parent=35 // pred_check
          %p1268 = pneg %p140
        $region42: #{tpu_custom_call.1} parent=35 // pred_check_branch
          %1270 = sbr.rel (%p1268) target = $region44
        $region43: #{tpu_custom_call.1} parent=35 // pred_region
          %s1272 = ssub.s32 512, 512
          %1273 = vsyncadd %s1264, %s1272
          %s1274 = smul.addr %s23, 4
          %s1275 = sadd.s32 %s24, %s1274
          %s1276 = smul.addr %s1275, 128
          %s1277 = scalar_lea.hbm %s4, %s1276
          %s1278 = sshll.u32 %s1267, 4
          %s1279 = int_to_ptr.vmem [resolvable:$true] %s1278
          %1284 = dma.vmem_to_hbm [thread:$0]  %s1279, 512, %s1277, %s1264, 128, 128, 8
        $region44: #{tpu_custom_call.1} parent=35 // pred_fallthru
          _
      $region36: #{tpu_custom_call.1} parent=5 // pred_fallthru
        _
      %p1285 = scmp.le.s32.totalorder 2, %s14
      // Predicated region
      $region45: #{tpu_custom_call.1} parent=5 // pred_check
        %p1286 = pneg %p1285
      $region46: #{tpu_custom_call.1} parent=5 // pred_check_branch
        %1288 = sbr.rel (%p1286) target = $region48
      $region47: #{tpu_custom_call.1} parent=5 // pred_region
        %s1289 = ssub.s32 %s14, 2
        // Predicated region
        $region49: #{tpu_custom_call.1} parent=47 // pred_check
          %p1290 = pneg %p146
        $region50: #{tpu_custom_call.1} parent=47 // pred_check_branch
          %1292 = sbr.rel (%p1290) target = $region52
        $region51: #{tpu_custom_call.1} parent=47 // pred_region
          %s1293 = sand.u32 %s131, 1
          %s1294 = scalar_lea.sflag [#allocation5], %s1293
          %s1295 = sand.u32 %s131, 1
          %s1296 = smul.addr %s1295, 32
          %s1297 = scalar_lea.vmem [#allocation4], %s1296
          %1298 = dma.done %s1294, 512
        $region52: #{tpu_custom_call.1} parent=47 // pred_fallthru
          _
      $region48: #{tpu_custom_call.1} parent=5 // pred_fallthru
        _
    $region6: #{tpu_custom_call.1} parent=1 // loop_footer
      %s18 = sadd.s32 1, %s14
    $region7: #{tpu_custom_call.1} parent=1 // loop_footer_branch
      %13 = sbr.rel target = $region3
    $region8: #{tpu_custom_call.1} parent=1 // loop_exit
      _
    %1299 = vsyncpa [#allocation5], 1
    %s1300 = scalar_lea.sflag [#allocation5], 1
    %1301 = vsyncpa %s1300, 1

</llo_original>
